<compile_context>
chip_gen: v6e
topology: v6e:2x2x1
jax: 0.10.0
libtpu: 0.0.40
codegen_flags: <defaults>
</compile_context>

<pallas_src>
import functools

import jax
import jax.numpy as jnp
import numpy as np
from jax.experimental import pallas as pl
from jax.experimental.pallas import tpu as pltpu

EPS = 1e-6


def _cafm_kernel(x_ref, red_ref, bcast_ref, lnsb_ref, wqkv_ref, mw_ref,
                 wpw_ref, wproj_ref, o_ref, *, C, W, N, mxu_dtype):
    f32 = jnp.float32
    x = x_ref[...]                                   # (C, N): batch+pixels on lanes

    # ---- LayerNorm over W: one stacked MXU matmul for E[x], E[x^2] ----------
    # stacked (2C, N) @ red (N, G) -> per-(c, b, h) stats (2C, G); variance and
    # rsqrt on the small array, then one (2C, G) @ (G, N) broadcast-back matmul.
    stacked = jnp.concatenate([x, x * x], axis=0)
    stats = jnp.dot(stacked, red_ref[...], preferred_element_type=f32)   # (2C, G)
    mean_g = stats[:C]
    # One-pass variance; clamp guards tiny negatives from cancellation.
    # TODO(synk): switch to a two-pass (x - mean) variance if this kernel is
    # used on non-unit-scale data where E[x^2] - E[x]^2 cancels catastrophically.
    var_g = jnp.maximum(stats[C:] - mean_g * mean_g, 0.0)
    inv_g = jax.lax.rsqrt(var_g + EPS)
    mb = jnp.dot(jnp.concatenate([mean_g, inv_g], axis=0), bcast_ref[...],
                 preferred_element_type=f32)                             # (2C, N)
    lnsb = lnsb_ref[...]                                                 # (2, N)
    xn = (x - mb[:C]) * mb[C:] * lnsb[0:1, :] + lnsb[1:2, :]

    # ---- fused q/k/v 1x1 convs: one (3C, C) @ (C, N) bf16 MXU matmul --------
    qkv = jnp.dot(wqkv_ref[...], xn.astype(mxu_dtype), preferred_element_type=f32)
    q, k, v = qkv[:C], qkv[C:2 * C], qkv[2 * C:]
    qk = q * k

    # ---- depthwise 3x3 (padding=1, groups=C): 8 XLU lane rolls --------------
    # mw_ref[t] = outer(w_dw[:, t], border_mask[t]) precomputed host-side, so
    # each tap is one roll + one vmul.  The border masks also zero every
    # destination whose roll source would wrap into a neighbouring batch slab.
    dw = qk * mw_ref[4]                              # centre tap: no shift
    tap = 0
    for di in range(3):
        for dj in range(3):
            s = (di - 1) * W + (dj - 1)              # source offset in flattened pixels
            if s != 0:
                dw = dw + pltpu.roll(qk, shift=(-s) % N, axis=1) * mw_ref[tap]
            tap += 1

    # ---- pointwise conv + sigmoid gate, value modulation, final projection --
    attn = jax.nn.sigmoid(jnp.dot(wpw_ref[...], dw.astype(mxu_dtype),
                                  preferred_element_type=f32))
    out = jnp.dot(wproj_ref[...], (v * attn).astype(mxu_dtype),
                  preferred_element_type=f32)
    o_ref[...] = out.astype(o_ref.dtype)             # lane-dense store


def cafm_attention(x_nchw, ln_w, ln_b, wq, wk, wv, wdw, wpw, wproj, *,
                   batch_tile=None, mxu_dtype=jnp.bfloat16):
    """x_nchw: (B, C, H, W).  1x1-conv weights in PyTorch (C_out, C_in) layout,
    depthwise weight as (C, 3, 3) (PyTorch (C, 1, 3, 3) squeezed)."""
    B, C, H, W = x_nchw.shape
    assert W == C, "LayerNorm(dim) broadcast over W requires W == dim (as in the PyTorch module)"
    HW = H * W
    bt = B if batch_tile is None else batch_tile
    assert B % bt == 0
    n_tiles = B // bt
    N = bt * HW           # columns (lanes) per grid step
    G = bt * H            # (batch, row) normalization groups per grid step
    if n_tiles > 1:
        assert N % 128 == 0 and C % 8 == 0, "tiled batch blocks must be lane/sublane dense"
    f32 = jnp.float32

    # Channels-first, batch+pixels on lanes: (B, C, H, W) -> (C, B*HW).
    x_cols = jnp.transpose(x_nchw.astype(f32), (1, 0, 2, 3)).reshape(C, B * HW)

    # Per-tile column bookkeeping (pattern is identical for every batch tile).
    cols = np.arange(N)
    h_of = (cols % HW) // W
    w_of = cols % W
    g_of = (cols // HW) * H + h_of

    # Two-stage LayerNorm reduction matrices: (N, G) 1/W reduce + (G, N) broadcast.
    red_np = np.zeros((N, G), np.float32)
    red_np[cols, g_of] = 1.0 / W
    bcast_np = np.zeros((G, N), np.float32)
    bcast_np[g_of, cols] = 1.0
    red = jnp.asarray(red_np)
    bcast = jnp.asarray(bcast_np)

    # LayerNorm scale/shift indexed by w, as a single (2, N) constant.
    lnsb = jnp.stack([ln_w.astype(f32)[w_of], ln_b.astype(f32)[w_of]], axis=0)

    # Fused q/k/v weight (PyTorch (out, in) layout), bf16 operands for the MXU.
    wqkv = jnp.concatenate([wq, wk, wv], axis=0).astype(mxu_dtype)       # (3C, C)

    # Depthwise taps pre-multiplied by their border masks: (9, C, N), f32 (VPU).
    mw_list = []
    for di in range(3):
        for dj in range(3):
            hs, ws = h_of + di - 1, w_of + dj - 1
            valid = ((hs >= 0) & (hs < H) & (ws >= 0) & (ws < W)).astype(np.float32)
            mw_list.append(wdw[:, di, dj].astype(f32)[:, None]
                           * jnp.asarray(valid)[None, :])
    mw = jnp.stack(mw_list, axis=0)                                      # (9, C, N)

    wpw_c = wpw.astype(mxu_dtype)
    wproj_c = wproj.astype(mxu_dtype)

    # Advisory cost estimate (per call).
    ln_flops = 2 * (2 * (2 * C) * N * G)             # reduce + broadcast-back matmuls
    mm_flops = 2 * (3 * C) * C * N + 2 * 2 * C * C * N
    dw_flops = 27 * C * N
    ew_flops = 16 * C * N
    cost = pl.CostEstimate(
        flops=n_tiles * (ln_flops + mm_flops + dw_flops + ew_flops),
        transcendentals=n_tiles * (C * G + C * N),   # rsqrt (small) + sigmoid
        bytes_accessed=(4 * (2 * C * B * HW + 2 * N * G + 2 * N + 9 * C * N)
                        + 2 * (3 * C * C + 2 * C * C)))

    def const2(shape):
        return pl.BlockSpec(shape, lambda i: (0, 0))

    out_cols = pl.pallas_call(
        functools.partial(_cafm_kernel, C=C, W=W, N=N, mxu_dtype=mxu_dtype),
        out_shape=jax.ShapeDtypeStruct((C, B * HW), f32),
        grid_spec=pl.GridSpec(
            grid=(n_tiles,),
            in_specs=[
                pl.BlockSpec((C, N), lambda i: (0, i)),    # x slab (lane-dense)
                const2((N, G)),                            # LN reduce matrix
                const2((G, N)),                            # LN broadcast-back matrix
                const2((2, N)),                            # LN scale / shift
                const2((3 * C, C)),                        # fused Wq|Wk|Wv (bf16)
                pl.BlockSpec((9, C, N), lambda i: (0, 0, 0)),  # masked dw taps
                const2((C, C)),                            # Wpw (bf16)
                const2((C, C)),                            # Wproj (bf16)
            ],
            out_specs=pl.BlockSpec((C, N), lambda i: (0, i)),
        ),
        compiler_params=pltpu.CompilerParams(
            dimension_semantics=("arbitrary",)),
        cost_estimate=cost,
    )(x_cols, red, bcast, lnsb, wqkv, mw, wpw_c, wproj_c)

    return jnp.transpose(out_cols.reshape(C, B, H, W), (1, 0, 2, 3))


def cafm_reference(x, ln_w, ln_b, wq, wk, wv, wdw, wpw, wproj):
    """Pure-JAX NCHW reference mirroring the PyTorch forward exactly (f32 HIGHEST)."""
    B, C, H, W = x.shape
    mean = x.mean(-1, keepdims=True)
    var = ((x - mean) ** 2).mean(-1, keepdims=True)
    xn = (x - mean) / jnp.sqrt(var + EPS) * ln_w + ln_b       # (dim,) broadcasts over W

    hi = jax.lax.Precision.HIGHEST
    conv1x1 = lambda t, w: jnp.einsum('oc,bchw->bohw', w, t, precision=hi)
    q, k, v = conv1x1(xn, wq), conv1x1(xn, wk), conv1x1(xn, wv)
    qk = q * k
    pad = jnp.pad(qk, ((0, 0), (0, 0), (1, 1), (1, 1)))
    dw = jnp.zeros_like(qk)
    for di in range(3):
        for dj in range(3):
            dw = dw + pad[:, :, di:di + H, dj:dj + W] * wdw[:, di, dj][None, :, None, None]
    attn = jax.nn.sigmoid(conv1x1(dw, wpw))
    return conv1x1(v * attn, wproj)


if __name__ == "__main__":
    B, dim, H = 2, 16, 8
    C, W = dim, dim  # module's LayerNorm broadcast requires W == dim

    key = jax.random.PRNGKey(0)
    ks = jax.random.split(key, 10)
    x = jax.random.normal(ks[0], (B, C, H, W), jnp.float32)

    # Deterministic synthetic parameters (shapes from the module's __init__).
    ln_w = 1.0 + 0.1 * jax.random.normal(ks[1], (dim,), jnp.float32)
    ln_b = 0.1 * jax.random.normal(ks[2], (dim,), jnp.float32)
    wq = 0.2 * jax.random.normal(ks[3], (C, C), jnp.float32)       # (C_out, C_in)
    wk = 0.2 * jax.random.normal(ks[4], (C, C), jnp.float32)
    wv = 0.2 * jax.random.normal(ks[5], (C, C), jnp.float32)
    wdw = 0.2 * jax.random.normal(ks[6], (C, 3, 3), jnp.float32)   # depthwise 3x3
    wpw = 0.2 * jax.random.normal(ks[7], (C, C), jnp.float32)
    wproj = 0.2 * jax.random.normal(ks[8], (C, C), jnp.float32)

    out = cafm_attention(x, ln_w, ln_b, wq, wk, wv, wdw, wpw, wproj)
    out = jax.block_until_ready(out)

    ref = cafm_reference(x, ln_w, ln_b, wq, wk, wv, wdw, wpw, wproj)
    # Tolerance covers bf16 MXU operand rounding on the q/k/v, pw and proj
    # matmuls (f32 accumulation); structural errors are orders of magnitude
    # larger than this level.
    np.testing.assert_allclose(np.asarray(out), np.asarray(ref), rtol=2e-2, atol=2e-2)

    print("KERNEL_OK")
</pallas_src>

<mosaic_0001>
module attributes {stable_mosaic.version = 11 : i64} {
  func.func @_cafm_kernel(%arg0: i32, %arg1: memref<16x256xf32, #tpu.memory_space<vmem>>, %arg2: memref<256x16xf32, #tpu.memory_space<vmem>>, %arg3: memref<16x256xf32, #tpu.memory_space<vmem>>, %arg4: memref<2x256xf32, #tpu.memory_space<vmem>>, %arg5: memref<48x16xbf16, #tpu.memory_space<vmem>>, %arg6: memref<9x16x256xf32, #tpu.memory_space<vmem>>, %arg7: memref<16x16xbf16, #tpu.memory_space<vmem>>, %arg8: memref<16x16xbf16, #tpu.memory_space<vmem>>, %arg9: memref<16x256xf32, #tpu.memory_space<vmem>>) attributes {dimension_semantics = [#tpu.dimension_semantics<arbitrary>], iteration_bounds = array<i64: 1>, scalar_prefetch = 0 : i64, scratch_operands = 0 : i64, tpu.core_type = #tpu.core_type<tc>, window_params = [{transform_indices = @transform_0, window_bounds = array<i64: 16, 256>}, {pipeline_mode = #tpu.pipeline_mode<synchronous>, transform_indices = @transform_1, window_bounds = array<i64: 256, 16>}, {pipeline_mode = #tpu.pipeline_mode<synchronous>, transform_indices = @transform_2, window_bounds = array<i64: 16, 256>}, {pipeline_mode = #tpu.pipeline_mode<synchronous>, transform_indices = @transform_3, window_bounds = array<i64: 2, 256>}, {pipeline_mode = #tpu.pipeline_mode<synchronous>, transform_indices = @transform_4, window_bounds = array<i64: 48, 16>}, {pipeline_mode = #tpu.pipeline_mode<synchronous>, transform_indices = @transform_5, window_bounds = array<i64: 9, 16, 256>}, {pipeline_mode = #tpu.pipeline_mode<synchronous>, transform_indices = @transform_6, window_bounds = array<i64: 16, 16>}, {pipeline_mode = #tpu.pipeline_mode<synchronous>, transform_indices = @transform_7, window_bounds = array<i64: 16, 16>}, {transform_indices = @transform_8, window_bounds = array<i64: 16, 256>}]} {
    %c0 = arith.constant 0 : index
    %c0_0 = arith.constant 0 : index
    %0 = vector.load %arg1[%c0, %c0_0] : memref<16x256xf32, #tpu.memory_space<vmem>>, vector<16x256xf32>
    %1 = arith.mulf %0, %0 : vector<16x256xf32>
    %2 = tpu.concatenate %0, %1 in 0 : vector<16x256xf32>, vector<16x256xf32> -> vector<32x256xf32>
    %c0_1 = arith.constant 0 : index
    %c0_2 = arith.constant 0 : index
    %3 = vector.load %arg2[%c0_1, %c0_2] : memref<256x16xf32, #tpu.memory_space<vmem>>, vector<256x16xf32>
    %cst = arith.constant dense<0.000000e+00> : vector<32x16xf32>
    %4 = tpu.matmul %2, %3, %cst {dimension_numbers = #tpu.dot_dimension_numbers<[1], [0], [0], [1], [0, 0, 1, 1], [], []>} : vector<32x256xf32>, vector<256x16xf32>, vector<32x16xf32> -> vector<32x16xf32>
    %5 = vector.extract_strided_slice %4 {offsets = [0, 0], sizes = [16, 16], strides = [1, 1]} : vector<32x16xf32> to vector<16x16xf32>
    %6 = vector.extract_strided_slice %4 {offsets = [16, 0], sizes = [16, 16], strides = [1, 1]} : vector<32x16xf32> to vector<16x16xf32>
    %7 = arith.mulf %5, %5 : vector<16x16xf32>
    %8 = arith.subf %6, %7 : vector<16x16xf32>
    %cst_3 = arith.constant 0.000000e+00 : f32
    %9 = vector.broadcast %cst_3 : f32 to vector<16x16xf32>
    %10 = arith.maximumf %8, %9 : vector<16x16xf32>
    %cst_4 = arith.constant 9.99999997E-7 : f32
    %11 = vector.broadcast %cst_4 : f32 to vector<16x16xf32>
    %12 = arith.addf %10, %11 : vector<16x16xf32>
    %13 = math.rsqrt %12 : vector<16x16xf32>
    %14 = tpu.concatenate %5, %13 in 0 : vector<16x16xf32>, vector<16x16xf32> -> vector<32x16xf32>
    %c0_5 = arith.constant 0 : index
    %c0_6 = arith.constant 0 : index
    %15 = vector.load %arg3[%c0_5, %c0_6] : memref<16x256xf32, #tpu.memory_space<vmem>>, vector<16x256xf32>
    %cst_7 = arith.constant dense<0.000000e+00> : vector<32x256xf32>
    %16 = tpu.matmul %14, %15, %cst_7 {dimension_numbers = #tpu.dot_dimension_numbers<[1], [0], [0], [1], [0, 0, 1, 1], [], []>} : vector<32x16xf32>, vector<16x256xf32>, vector<32x256xf32> -> vector<32x256xf32>
    %c0_8 = arith.constant 0 : index
    %c0_9 = arith.constant 0 : index
    %17 = vector.load %arg4[%c0_8, %c0_9] : memref<2x256xf32, #tpu.memory_space<vmem>>, vector<2x256xf32>
    %18 = vector.extract_strided_slice %16 {offsets = [0, 0], sizes = [16, 256], strides = [1, 1]} : vector<32x256xf32> to vector<16x256xf32>
    %19 = arith.subf %0, %18 : vector<16x256xf32>
    %20 = vector.extract_strided_slice %16 {offsets = [16, 0], sizes = [16, 256], strides = [1, 1]} : vector<32x256xf32> to vector<16x256xf32>
    %21 = arith.mulf %19, %20 : vector<16x256xf32>
    %22 = vector.extract_strided_slice %17 {offsets = [0, 0], sizes = [1, 256], strides = [1, 1]} : vector<2x256xf32> to vector<1x256xf32>
    %23 = vector.broadcast %22 : vector<1x256xf32> to vector<16x256xf32>
    %24 = arith.mulf %21, %23 : vector<16x256xf32>
    %25 = vector.extract_strided_slice %17 {offsets = [1, 0], sizes = [1, 256], strides = [1, 1]} : vector<2x256xf32> to vector<1x256xf32>
    %26 = vector.broadcast %25 : vector<1x256xf32> to vector<16x256xf32>
    %27 = arith.addf %24, %26 : vector<16x256xf32>
    %c0_10 = arith.constant 0 : index
    %c0_11 = arith.constant 0 : index
    %28 = vector.load %arg5[%c0_10, %c0_11] : memref<48x16xbf16, #tpu.memory_space<vmem>>, vector<48x16xbf16>
    %29 = arith.truncf %27 : vector<16x256xf32> to vector<16x256xbf16>
    %cst_12 = arith.constant dense<0.000000e+00> : vector<48x256xf32>
    %30 = tpu.matmul %28, %29, %cst_12 {dimension_numbers = #tpu.dot_dimension_numbers<[1], [0], [0], [1], [0, 0, 1, 1], [], []>} : vector<48x16xbf16>, vector<16x256xbf16>, vector<48x256xf32> -> vector<48x256xf32>
    %31 = vector.extract_strided_slice %30 {offsets = [0, 0], sizes = [16, 256], strides = [1, 1]} : vector<48x256xf32> to vector<16x256xf32>
    %32 = vector.extract_strided_slice %30 {offsets = [16, 0], sizes = [16, 256], strides = [1, 1]} : vector<48x256xf32> to vector<16x256xf32>
    %33 = vector.extract_strided_slice %30 {offsets = [32, 0], sizes = [16, 256], strides = [1, 1]} : vector<48x256xf32> to vector<16x256xf32>
    %34 = arith.mulf %31, %32 : vector<16x256xf32>
    %c4 = arith.constant 4 : index
    %c0_13 = arith.constant 0 : index
    %c0_14 = arith.constant 0 : index
    %35 = vector.load %arg6[%c4, %c0_13, %c0_14] : memref<9x16x256xf32, #tpu.memory_space<vmem>>, vector<1x16x256xf32>
    %36 = vector.shape_cast %35 : vector<1x16x256xf32> to vector<16x256xf32>
    %37 = arith.mulf %34, %36 : vector<16x256xf32>
    %c17_i32 = arith.constant 17 : i32
    %38 = tpu.dynamic_rotate %34 by %c17_i32 dim 1 : vector<16x256xf32>, i32 -> vector<16x256xf32>
    %c0_15 = arith.constant 0 : index
    %c0_16 = arith.constant 0 : index
    %c0_17 = arith.constant 0 : index
    %39 = vector.load %arg6[%c0_15, %c0_16, %c0_17] : memref<9x16x256xf32, #tpu.memory_space<vmem>>, vector<1x16x256xf32>
    %40 = vector.shape_cast %39 : vector<1x16x256xf32> to vector<16x256xf32>
    %41 = arith.mulf %38, %40 : vector<16x256xf32>
    %42 = arith.addf %37, %41 : vector<16x256xf32>
    %c16_i32 = arith.constant 16 : i32
    %43 = tpu.dynamic_rotate %34 by %c16_i32 dim 1 : vector<16x256xf32>, i32 -> vector<16x256xf32>
    %c1 = arith.constant 1 : index
    %c0_18 = arith.constant 0 : index
    %c0_19 = arith.constant 0 : index
    %44 = vector.load %arg6[%c1, %c0_18, %c0_19] : memref<9x16x256xf32, #tpu.memory_space<vmem>>, vector<1x16x256xf32>
    %45 = vector.shape_cast %44 : vector<1x16x256xf32> to vector<16x256xf32>
    %46 = arith.mulf %43, %45 : vector<16x256xf32>
    %47 = arith.addf %42, %46 : vector<16x256xf32>
    %c15_i32 = arith.constant 15 : i32
    %48 = tpu.dynamic_rotate %34 by %c15_i32 dim 1 : vector<16x256xf32>, i32 -> vector<16x256xf32>
    %c2 = arith.constant 2 : index
    %c0_20 = arith.constant 0 : index
    %c0_21 = arith.constant 0 : index
    %49 = vector.load %arg6[%c2, %c0_20, %c0_21] : memref<9x16x256xf32, #tpu.memory_space<vmem>>, vector<1x16x256xf32>
    %50 = vector.shape_cast %49 : vector<1x16x256xf32> to vector<16x256xf32>
    %51 = arith.mulf %48, %50 : vector<16x256xf32>
    %52 = arith.addf %47, %51 : vector<16x256xf32>
    %c1_i32 = arith.constant 1 : i32
    %53 = tpu.dynamic_rotate %34 by %c1_i32 dim 1 : vector<16x256xf32>, i32 -> vector<16x256xf32>
    %c3 = arith.constant 3 : index
    %c0_22 = arith.constant 0 : index
    %c0_23 = arith.constant 0 : index
    %54 = vector.load %arg6[%c3, %c0_22, %c0_23] : memref<9x16x256xf32, #tpu.memory_space<vmem>>, vector<1x16x256xf32>
    %55 = vector.shape_cast %54 : vector<1x16x256xf32> to vector<16x256xf32>
    %56 = arith.mulf %53, %55 : vector<16x256xf32>
    %57 = arith.addf %52, %56 : vector<16x256xf32>
    %c255_i32 = arith.constant 255 : i32
    %58 = tpu.dynamic_rotate %34 by %c255_i32 dim 1 : vector<16x256xf32>, i32 -> vector<16x256xf32>
    %c5 = arith.constant 5 : index
    %c0_24 = arith.constant 0 : index
    %c0_25 = arith.constant 0 : index
    %59 = vector.load %arg6[%c5, %c0_24, %c0_25] : memref<9x16x256xf32, #tpu.memory_space<vmem>>, vector<1x16x256xf32>
    %60 = vector.shape_cast %59 : vector<1x16x256xf32> to vector<16x256xf32>
    %61 = arith.mulf %58, %60 : vector<16x256xf32>
    %62 = arith.addf %57, %61 : vector<16x256xf32>
    %c241_i32 = arith.constant 241 : i32
    %63 = tpu.dynamic_rotate %34 by %c241_i32 dim 1 : vector<16x256xf32>, i32 -> vector<16x256xf32>
    %c6 = arith.constant 6 : index
    %c0_26 = arith.constant 0 : index
    %c0_27 = arith.constant 0 : index
    %64 = vector.load %arg6[%c6, %c0_26, %c0_27] : memref<9x16x256xf32, #tpu.memory_space<vmem>>, vector<1x16x256xf32>
    %65 = vector.shape_cast %64 : vector<1x16x256xf32> to vector<16x256xf32>
    %66 = arith.mulf %63, %65 : vector<16x256xf32>
    %67 = arith.addf %62, %66 : vector<16x256xf32>
    %c240_i32 = arith.constant 240 : i32
    %68 = tpu.dynamic_rotate %34 by %c240_i32 dim 1 : vector<16x256xf32>, i32 -> vector<16x256xf32>
    %c7 = arith.constant 7 : index
    %c0_28 = arith.constant 0 : index
    %c0_29 = arith.constant 0 : index
    %69 = vector.load %arg6[%c7, %c0_28, %c0_29] : memref<9x16x256xf32, #tpu.memory_space<vmem>>, vector<1x16x256xf32>
    %70 = vector.shape_cast %69 : vector<1x16x256xf32> to vector<16x256xf32>
    %71 = arith.mulf %68, %70 : vector<16x256xf32>
    %72 = arith.addf %67, %71 : vector<16x256xf32>
    %c239_i32 = arith.constant 239 : i32
    %73 = tpu.dynamic_rotate %34 by %c239_i32 dim 1 : vector<16x256xf32>, i32 -> vector<16x256xf32>
    %c8 = arith.constant 8 : index
    %c0_30 = arith.constant 0 : index
    %c0_31 = arith.constant 0 : index
    %74 = vector.load %arg6[%c8, %c0_30, %c0_31] : memref<9x16x256xf32, #tpu.memory_space<vmem>>, vector<1x16x256xf32>
    %75 = vector.shape_cast %74 : vector<1x16x256xf32> to vector<16x256xf32>
    %76 = arith.mulf %73, %75 : vector<16x256xf32>
    %77 = arith.addf %72, %76 : vector<16x256xf32>
    %c0_32 = arith.constant 0 : index
    %c0_33 = arith.constant 0 : index
    %78 = vector.load %arg7[%c0_32, %c0_33] : memref<16x16xbf16, #tpu.memory_space<vmem>>, vector<16x16xbf16>
    %79 = arith.truncf %77 : vector<16x256xf32> to vector<16x256xbf16>
    %cst_34 = arith.constant dense<0.000000e+00> : vector<16x256xf32>
    %80 = tpu.matmul %78, %79, %cst_34 {dimension_numbers = #tpu.dot_dimension_numbers<[1], [0], [0], [1], [0, 0, 1, 1], [], []>} : vector<16x16xbf16>, vector<16x256xbf16>, vector<16x256xf32> -> vector<16x256xf32>
    %81 = arith.negf %80 : vector<16x256xf32>
    %82 = math.exp %81 : vector<16x256xf32>
    %cst_35 = arith.constant 1.000000e+00 : f32
    %83 = vector.broadcast %cst_35 : f32 to vector<16x256xf32>
    %84 = arith.addf %83, %82 : vector<16x256xf32>
    %85 = arith.divf %83, %84 : vector<16x256xf32>
    %c0_36 = arith.constant 0 : index
    %c0_37 = arith.constant 0 : index
    %86 = vector.load %arg8[%c0_36, %c0_37] : memref<16x16xbf16, #tpu.memory_space<vmem>>, vector<16x16xbf16>
    %87 = arith.mulf %33, %85 : vector<16x256xf32>
    %88 = arith.truncf %87 : vector<16x256xf32> to vector<16x256xbf16>
    %cst_38 = arith.constant dense<0.000000e+00> : vector<16x256xf32>
    %89 = tpu.matmul %86, %88, %cst_38 {dimension_numbers = #tpu.dot_dimension_numbers<[1], [0], [0], [1], [0, 0, 1, 1], [], []>} : vector<16x16xbf16>, vector<16x256xbf16>, vector<16x256xf32> -> vector<16x256xf32>
    %c0_39 = arith.constant 0 : index
    %c0_40 = arith.constant 0 : index
    %90 = vector.load %arg9[%c0_39, %c0_40] : memref<16x256xf32, #tpu.memory_space<vmem>>, vector<16x256xf32>
    tpu.vector_store %arg9[%c0_39, %c0_40], %89 {strides = array<i32>} : memref<16x256xf32, #tpu.memory_space<vmem>>, vector<16x256xf32>,
    return
  }
  func.func @transform_0(%arg0: i32) -> (i32, i32) {
    %c0_i32 = arith.constant 0 : i32
    %c0_i32_0 = arith.constant 0 : i32
    return %c0_i32, %arg0 : i32, i32
  }
  func.func @transform_1(%arg0: i32) -> (i32, i32) {
    %c0_i32 = arith.constant 0 : i32
    %c0_i32_0 = arith.constant 0 : i32
    %c0_i32_1 = arith.constant 0 : i32
    return %c0_i32, %c0_i32_0 : i32, i32
  }
  func.func @transform_2(%arg0: i32) -> (i32, i32) {
    %c0_i32 = arith.constant 0 : i32
    %c0_i32_0 = arith.constant 0 : i32
    %c0_i32_1 = arith.constant 0 : i32
    return %c0_i32, %c0_i32_0 : i32, i32
  }
  func.func @transform_3(%arg0: i32) -> (i32, i32) {
    %c0_i32 = arith.constant 0 : i32
    %c0_i32_0 = arith.constant 0 : i32
    %c0_i32_1 = arith.constant 0 : i32
    return %c0_i32, %c0_i32_0 : i32, i32
  }
  func.func @transform_4(%arg0: i32) -> (i32, i32) {
    %c0_i32 = arith.constant 0 : i32
    %c0_i32_0 = arith.constant 0 : i32
    %c0_i32_1 = arith.constant 0 : i32
    return %c0_i32, %c0_i32_0 : i32, i32
  }
  func.func @transform_5(%arg0: i32) -> (i32, i32, i32) {
    %c0_i32 = arith.constant 0 : i32
    %c0_i32_0 = arith.constant 0 : i32
    %c0_i32_1 = arith.constant 0 : i32
    %c0_i32_2 = arith.constant 0 : i32
    return %c0_i32, %c0_i32_0, %c0_i32_1 : i32, i32, i32
  }
  func.func @transform_6(%arg0: i32) -> (i32, i32) {
    %c0_i32 = arith.constant 0 : i32
    %c0_i32_0 = arith.constant 0 : i32
    %c0_i32_1 = arith.constant 0 : i32
    return %c0_i32, %c0_i32_0 : i32, i32
  }
  func.func @transform_7(%arg0: i32) -> (i32, i32) {
    %c0_i32 = arith.constant 0 : i32
    %c0_i32_0 = arith.constant 0 : i32
    %c0_i32_1 = arith.constant 0 : i32
    return %c0_i32, %c0_i32_0 : i32, i32
  }
  func.func @transform_8(%arg0: i32) -> (i32, i32) {
    %c0_i32 = arith.constant 0 : i32
    %c0_i32_0 = arith.constant 0 : i32
    return %c0_i32, %arg0 : i32, i32
  }
}

</mosaic_0001>

<llo_original>
// kernel: tpu_custom_call.1
$region0: #{tpu_custom_call.1}
  #allocation0 [shape = 'u32[]', space=smem, size = 0x4, offset = 0x4, fixed_abs, tag = 'smem constant byte address 0x4 - core index']
  #allocation1 [shape = 'u32[144,128]{1,0:T(1,128)}', space=vmem, size = 0x12000, scoped, tag = 'internal scratch']
  %s0 = inlined_call_operand.vmem [shape: f32[16,256], index: 0, kind: input, shape index: {}]
  %s1 = inlined_call_operand.vmem [shape: f32[256,16], index: 1, kind: input, shape index: {}]
  %s2 = inlined_call_operand.hbm [shape: f32[16,256], index: 2, kind: input, shape index: {}]
  %s3 = inlined_call_operand.hbm [shape: f32[2,256], index: 3, kind: input, shape index: {}]
  %s4 = inlined_call_operand.vmem [shape: bf16[48,16], index: 4, kind: input, shape index: {}]
  %s5 = inlined_call_operand.vmem [shape: f32[9,16,256], index: 5, kind: input, shape index: {}]
  %s6 = inlined_call_operand.vmem [shape: bf16[16,16], index: 6, kind: input, shape index: {}]
  %s7 = inlined_call_operand.hbm [shape: bf16[16,16], index: 7, kind: input, shape index: {}]
  %s8 = inlined_call_operand.hbm [shape: f32[16,256], index: 8, kind: output, shape index: {}]
  %s9 = sld [smem:[#allocation0]]
  $region54: #{tpu_custom_call.1} parent=0
    _
  %s11 = ssub.s32 1, %s9
  %s12 = scalar_select 0, %s11, %s9
  $region1: #{tpu_custom_call.1} parent=0
    #allocation2 [shape = 'u8[16384]{0}', space=vmem, size = 0x4000, scoped, tag = 'input window, operand 2, single buffered']
    #allocation3 [shape = 's32[1]{0}', space=sflag, size = 0x4, scoped, tag = 'scoped memory for tpu_custom_call.1']
    #allocation4 [shape = 's32[1]{0}', space=sflag, size = 0x4, scoped, tag = 'scoped memory for tpu_custom_call.1']
    #allocation5 [shape = 'u8[2048]{0}', space=vmem, size = 0x800, scoped, tag = 'input window, operand 3, single buffered']
    #allocation6 [shape = 's32[1]{0}', space=sflag, size = 0x4, scoped, tag = 'scoped memory for tpu_custom_call.1']
    #allocation7 [shape = 'u8[4096]{0}', space=vmem, size = 0x1000, scoped, tag = 'input window, operand 7, single buffered']
    #allocation8 [shape = 'u8[16384]{0}', space=vmem, size = 0x4000, scoped, tag = 'output window, operand 0, single buffered']
    %13 = vsyncpa [#allocation3], 0
    %14 = vsyncpa [#allocation6], 0
    %15 = vsyncpa [#allocation4], 0
    // Predicated region
    $region2: #{tpu_custom_call.1} parent=1 // pred_check
      _
    $region3: #{tpu_custom_call.1} parent=1 // pred_check_branch
      %17 = sbr.rel (0) target = $region5
    $region4: #{tpu_custom_call.1} parent=1 // pred_region
      _
    $region5: #{tpu_custom_call.1} parent=1 // pred_fallthru
      _
    // Predicated region
    $region6: #{tpu_custom_call.1} parent=1 // pred_check
      _
    $region7: #{tpu_custom_call.1} parent=1 // pred_check_branch
      %19 = sbr.rel (0) target = $region9
    $region8: #{tpu_custom_call.1} parent=1 // pred_region
      _
    $region9: #{tpu_custom_call.1} parent=1 // pred_fallthru
      _
    // Predicated region
    $region10: #{tpu_custom_call.1} parent=1 // pred_check
      _
    $region11: #{tpu_custom_call.1} parent=1 // pred_check_branch
      %21 = sbr.rel (0) target = $region13
    $region12: #{tpu_custom_call.1} parent=1 // pred_region
      %s23 = ssub.s32 512, 512
      %24 = vsyncadd [#allocation3], %s23
      %s25 = sshll.u32 [#allocation2], 4
      %s26 = int_to_ptr.vmem [resolvable:$true] %s25
      %31 = dma.hbm_to_vmem [thread:$0]  %s2, 512, %s26, [#allocation3], 256, 256, 16
    $region13: #{tpu_custom_call.1} parent=1 // pred_fallthru
      _
    // Predicated region
    $region14: #{tpu_custom_call.1} parent=1 // pred_check
      _
    $region15: #{tpu_custom_call.1} parent=1 // pred_check_branch
      %33 = sbr.rel (0) target = $region17
    $region16: #{tpu_custom_call.1} parent=1 // pred_region
      %s35 = ssub.s32 64, 64
      %36 = vsyncadd [#allocation6], %s35
      %s38 = sshll.u32 [#allocation5], 4
      %s39 = int_to_ptr.vmem [resolvable:$true] %s38
      %41 = dma.hbm_to_vmem [thread:$0]  %s3, 64, %s39, [#allocation6]
    $region17: #{tpu_custom_call.1} parent=1 // pred_fallthru
      _
    // Predicated region
    $region18: #{tpu_custom_call.1} parent=1 // pred_check
      _
    $region19: #{tpu_custom_call.1} parent=1 // pred_check_branch
      %43 = sbr.rel (0) target = $region21
    $region20: #{tpu_custom_call.1} parent=1 // pred_region
      _
    $region21: #{tpu_custom_call.1} parent=1 // pred_fallthru
      _
    // Predicated region
    $region22: #{tpu_custom_call.1} parent=1 // pred_check
      _
    $region23: #{tpu_custom_call.1} parent=1 // pred_check_branch
      %45 = sbr.rel (0) target = $region25
    $region24: #{tpu_custom_call.1} parent=1 // pred_region
      _
    $region25: #{tpu_custom_call.1} parent=1 // pred_fallthru
      _
    // Predicated region
    $region26: #{tpu_custom_call.1} parent=1 // pred_check
      _
    $region27: #{tpu_custom_call.1} parent=1 // pred_check_branch
      %47 = sbr.rel (0) target = $region29
    $region28: #{tpu_custom_call.1} parent=1 // pred_region
      _
    $region29: #{tpu_custom_call.1} parent=1 // pred_fallthru
      _
    // Predicated region
    $region30: #{tpu_custom_call.1} parent=1 // pred_check
      _
    $region31: #{tpu_custom_call.1} parent=1 // pred_check_branch
      %49 = sbr.rel (0) target = $region33
    $region32: #{tpu_custom_call.1} parent=1 // pred_region
      %s51 = ssub.s32 128, 128
      %52 = vsyncadd [#allocation6], %s51
      %s53 = sshll.u32 [#allocation7], 4
      %s54 = int_to_ptr.vmem [resolvable:$true] %s53
      %59 = dma.hbm_to_vmem [thread:$0]  %s7, 128, %s54, [#allocation6], 64, 64, 4
    $region33: #{tpu_custom_call.1} parent=1 // pred_fallthru
      _
    // Predicated region
    $region34: #{tpu_custom_call.1} parent=1 // pred_check
      _
    $region35: #{tpu_custom_call.1} parent=1 // pred_check_branch
      %61 = sbr.rel (0) target = $region37
    $region36: #{tpu_custom_call.1} parent=1 // pred_region
      %62 = dma.done [#allocation3], 512
    $region37: #{tpu_custom_call.1} parent=1 // pred_fallthru
      _
    // Predicated region
    $region38: #{tpu_custom_call.1} parent=1 // pred_check
      _
    $region39: #{tpu_custom_call.1} parent=1 // pred_check_branch
      %64 = sbr.rel (0) target = $region41
    $region40: #{tpu_custom_call.1} parent=1 // pred_region
      %65 = dma.done [#allocation6], 64
    $region41: #{tpu_custom_call.1} parent=1 // pred_fallthru
      _
    // Predicated region
    $region42: #{tpu_custom_call.1} parent=1 // pred_check
      _
    $region43: #{tpu_custom_call.1} parent=1 // pred_check_branch
      %67 = sbr.rel (0) target = $region45
    $region44: #{tpu_custom_call.1} parent=1 // pred_region
      %68 = dma.done [#allocation6], 128
    $region45: #{tpu_custom_call.1} parent=1 // pred_fallthru
      _
    %v70 = vld [vmem:[%s0] sm:$0xff]
    %v71 = vld [vmem:[%s0 + $0x8] sm:$0xff]
    %v72 = vld [vmem:[%s0 + $0x10] sm:$0xff]
    %v73 = vld [vmem:[%s0 + $0x18] sm:$0xff]
    %v74 = vmul.f32 %v70, %v70
    %v75 = vmul.f32 %v71, %v71
    %v76 = vmul.f32 %v72, %v72
    %v77 = vmul.f32 %v73, %v73
    %v78 = vld [vmem:[%s1] sm:$0xff]
    %v79 = vld [vmem:[%s1 + $0x8] sm:$0xff]
    %v80 = vld [vmem:[%s1 + $0x10] sm:$0xff]
    %v81 = vld [vmem:[%s1 + $0x18] sm:$0xff]
    %v82 = vld [vmem:[%s1 + $0x20] sm:$0xff]
    %v83 = vld [vmem:[%s1 + $0x28] sm:$0xff]
    %v84 = vld [vmem:[%s1 + $0x30] sm:$0xff]
    %v85 = vld [vmem:[%s1 + $0x38] sm:$0xff]
    %v86 = vld [vmem:[%s1 + $0x40] sm:$0xff]
    %v87 = vld [vmem:[%s1 + $0x48] sm:$0xff]
    %v88 = vld [vmem:[%s1 + $0x50] sm:$0xff]
    %v89 = vld [vmem:[%s1 + $0x58] sm:$0xff]
    %v90 = vld [vmem:[%s1 + $0x60] sm:$0xff]
    %v91 = vld [vmem:[%s1 + $0x68] sm:$0xff]
    %v92 = vld [vmem:[%s1 + $0x70] sm:$0xff]
    %v93 = vld [vmem:[%s1 + $0x78] sm:$0xff]
    %v94 = vld [vmem:[%s1 + $0x80] sm:$0xff]
    %v95 = vld [vmem:[%s1 + $0x88] sm:$0xff]
    %v96 = vld [vmem:[%s1 + $0x90] sm:$0xff]
    %v97 = vld [vmem:[%s1 + $0x98] sm:$0xff]
    %v98 = vld [vmem:[%s1 + $0xa0] sm:$0xff]
    %v99 = vld [vmem:[%s1 + $0xa8] sm:$0xff]
    %v100 = vld [vmem:[%s1 + $0xb0] sm:$0xff]
    %v101 = vld [vmem:[%s1 + $0xb8] sm:$0xff]
    %v102 = vld [vmem:[%s1 + $0xc0] sm:$0xff]
    %v103 = vld [vmem:[%s1 + $0xc8] sm:$0xff]
    %v104 = vld [vmem:[%s1 + $0xd0] sm:$0xff]
    %v105 = vld [vmem:[%s1 + $0xd8] sm:$0xff]
    %v106 = vld [vmem:[%s1 + $0xe0] sm:$0xff]
    %v107 = vld [vmem:[%s1 + $0xe8] sm:$0xff]
    %v108 = vld [vmem:[%s1 + $0xf0] sm:$0xff]
    %v109 = vld [vmem:[%s1 + $0xf8] sm:$0xff]
    %110 = vmatprep.subr.mxu0 0.0
    %111 = vmatpush1.msra.mxu0 %v93
    %112 = vmatprep.subr.mxu0 0.0
    %113 = vmatpush1.msra.mxu0 %v92
    %114 = vmatprep.subr.mxu0 0.0
    %115 = vmatpush1.msra.mxu0 %v91
    %116 = vmatprep.subr.mxu0 0.0
    %117 = vmatpush1.msra.mxu0 %v90
    %118 = vmatprep.subr.mxu0 0.0
    %119 = vmatpush1.msra.mxu0 %v89
    %120 = vmatprep.subr.mxu0 0.0
    %121 = vmatpush1.msra.mxu0 %v88
    %122 = vmatprep.subr.mxu0 0.0
    %123 = vmatpush1.msra.mxu0 %v87
    %124 = vmatprep.subr.mxu0 0.0
    %125 = vmatpush1.msra.mxu0 %v86
    %126 = vmatprep.subr.mxu0 0.0
    %127 = vmatpush1.msra.mxu0 %v85
    %128 = vmatprep.subr.mxu0 0.0
    %129 = vmatpush1.msra.mxu0 %v84
    %130 = vmatprep.subr.mxu0 0.0
    %131 = vmatpush1.msra.mxu0 %v83
    %132 = vmatprep.subr.mxu0 0.0
    %133 = vmatpush1.msra.mxu0 %v82
    %134 = vmatprep.subr.mxu0 0.0
    %135 = vmatpush1.msra.mxu0 %v81
    %136 = vmatprep.subr.mxu0 0.0
    %137 = vmatpush1.msra.mxu0 %v80
    %138 = vmatprep.subr.mxu0 0.0
    %139 = vmatpush1.msra.mxu0 %v79
    %140 = vmatprep.subr.mxu0 0.0
    %141 = vmatpush1.msra.mxu0 %v78
    %142 = vmatprep.subr.mxu0 0.0
    %143 = vmatpush2.msra.mxu0 %v109
    %144 = vmatprep.subr.mxu0 0.0
    %145 = vmatpush2.msra.mxu0 %v108
    %146 = vmatprep.subr.mxu0 0.0
    %147 = vmatpush2.msra.mxu0 %v107
    %148 = vmatprep.subr.mxu0 0.0
    %149 = vmatpush2.msra.mxu0 %v106
    %150 = vmatprep.subr.mxu0 0.0
    %151 = vmatpush2.msra.mxu0 %v105
    %152 = vmatprep.subr.mxu0 0.0
    %153 = vmatpush2.msra.mxu0 %v104
    %154 = vmatprep.subr.mxu0 0.0
    %155 = vmatpush2.msra.mxu0 %v103
    %156 = vmatprep.subr.mxu0 0.0
    %157 = vmatpush2.msra.mxu0 %v102
    %158 = vmatprep.subr.mxu0 0.0
    %159 = vmatpush2.msra.mxu0 %v101
    %160 = vmatprep.subr.mxu0 0.0
    %161 = vmatpush2.msra.mxu0 %v100
    %162 = vmatprep.subr.mxu0 0.0
    %163 = vmatpush2.msra.mxu0 %v99
    %164 = vmatprep.subr.mxu0 0.0
    %165 = vmatpush2.msra.mxu0 %v98
    %166 = vmatprep.subr.mxu0 0.0
    %167 = vmatpush2.msra.mxu0 %v97
    %168 = vmatprep.subr.mxu0 0.0
    %169 = vmatpush2.msra.mxu0 %v96
    %170 = vmatprep.subr.mxu0 0.0
    %171 = vmatpush2.msra.mxu0 %v95
    %172 = vmatprep.subr.mxu0 0.0
    %173 = vmatpush2.msra.mxu0 %v94
    %174 = vmatprep.mubr.f32.mxu0 %v71
    %175 = vmatmul.mubr.f32.gmra.mxu0 %v70
    %v176 = vpop.f32.mrf.mxu0
    %v177 = vadd.f32 0.0, %v176
    %v178 = vpop.f32.mrf.mxu0
    %179 = vmatprep.mubr.f32.mxu0 %v73
    %180 = vmatmul.mubr.f32.gmra.mxu0 %v72
    %v181 = vpop.f32.mrf.mxu0
    %v182 = vadd.f32 0.0, %v181
    %v183 = vpop.f32.mrf.mxu0
    %184 = vmatprep.mubr.f32.mxu0 %v75
    %185 = vmatmul.mubr.f32.gmra.mxu0 %v74
    %v186 = vpop.f32.mrf.mxu0
    %v187 = vadd.f32 0.0, %v186
    %v188 = vpop.f32.mrf.mxu0
    %189 = vmatprep.mubr.f32.mxu0 %v77
    %190 = vmatmul.mubr.f32.gmra.mxu0 %v76
    %v191 = vpop.f32.mrf.mxu0
    %v192 = vadd.f32 0.0, %v191
    %v193 = vpop.f32.mrf.mxu0
    %194 = vdwg.mxu0
    %v195 = vmul.f32 %v177, %v177
    %v196 = vmul.f32 %v182, %v182
    %v197 = vsub.f32 %v187, %v195
    %v198 = vsub.f32 %v192, %v196
    %v199 = vmax.f32 %v197, 0.0
    %v200 = vmax.f32 %v198, 0.0
    %v201 = vadd.f32 %v199, 1e-06
    %v202 = vadd.f32 %v200, 1e-06
    %v203 = vrsqrt.pop %v201
    %v204 = vrsqrt.pop %v202
    %v205 = vld [vmem:[#allocation2] sm:$0xff]
    %v206 = vld [vmem:[#allocation2 + $0x8] sm:$0xff]
    %v207 = vld [vmem:[#allocation2 + $0x10] sm:$0xff]
    %v208 = vld [vmem:[#allocation2 + $0x18] sm:$0xff]
    %vm209 = vcmask 130048
    %v211 = vsel %vm209, %v177, 0
    %v214 = vsel %vm209, %v182, 0
    %v217 = vsel %vm209, %v203, 0
    %v220 = vsel %vm209, %v204, 0
    %222 = vmatprep.subr.mxu0 0.0
    %223 = vmatpush1.msra.mxu0 0.0
    %224 = vmatprep.subr.mxu0 0.0
    %225 = vmatpush1.msra.mxu0 0.0
    %226 = vmatprep.subr.mxu0 0.0
    %227 = vmatpush1.msra.mxu0 0.0
    %228 = vmatprep.subr.mxu0 0.0
    %229 = vmatpush1.msra.mxu0 0.0
    %230 = vmatprep.subr.mxu0 0.0
    %231 = vmatpush1.msra.mxu0 0.0
    %232 = vmatprep.subr.mxu0 0.0
    %233 = vmatpush1.msra.mxu0 0.0
    %234 = vmatprep.subr.mxu0 0.0
    %235 = vmatpush1.msra.mxu0 0.0
    %236 = vmatprep.subr.mxu0 0.0
    %237 = vmatpush1.msra.mxu0 0.0
    %238 = vmatprep.subr.mxu0 0.0
    %239 = vmatpush1.msra.mxu0 0.0
    %240 = vmatprep.subr.mxu0 0.0
    %241 = vmatpush1.msra.mxu0 0.0
    %242 = vmatprep.subr.mxu0 0.0
    %243 = vmatpush1.msra.mxu0 0.0
    %244 = vmatprep.subr.mxu0 0.0
    %245 = vmatpush1.msra.mxu0 0.0
    %246 = vmatprep.subr.mxu0 0.0
    %247 = vmatpush1.msra.mxu0 0.0
    %248 = vmatprep.subr.mxu0 0.0
    %249 = vmatpush1.msra.mxu0 0.0
    %250 = vmatprep.subr.mxu0 %v208
    %251 = vmatpush1.msra.mxu0 %v207
    %252 = vmatprep.subr.mxu0 %v206
    %253 = vmatpush1.msra.mxu0 %v205
    %254 = vmatprep.subr.mxu0 0.0
    %255 = vmatpush2.msra.mxu0 0.0
    %256 = vmatprep.subr.mxu0 0.0
    %257 = vmatpush2.msra.mxu0 0.0
    %258 = vmatprep.subr.mxu0 0.0
    %259 = vmatpush2.msra.mxu0 0.0
    %260 = vmatprep.subr.mxu0 0.0
    %261 = vmatpush2.msra.mxu0 0.0
    %262 = vmatprep.subr.mxu0 0.0
    %263 = vmatpush2.msra.mxu0 0.0
    %264 = vmatprep.subr.mxu0 0.0
    %265 = vmatpush2.msra.mxu0 0.0
    %266 = vmatprep.subr.mxu0 0.0
    %267 = vmatpush2.msra.mxu0 0.0
    %268 = vmatprep.subr.mxu0 0.0
    %269 = vmatpush2.msra.mxu0 0.0
    %270 = vmatprep.subr.mxu0 0.0
    %271 = vmatpush2.msra.mxu0 0.0
    %272 = vmatprep.subr.mxu0 0.0
    %273 = vmatpush2.msra.mxu0 0.0
    %274 = vmatprep.subr.mxu0 0.0
    %275 = vmatpush2.msra.mxu0 0.0
    %276 = vmatprep.subr.mxu0 0.0
    %277 = vmatpush2.msra.mxu0 0.0
    %278 = vmatprep.subr.mxu0 0.0
    %279 = vmatpush2.msra.mxu0 0.0
    %280 = vmatprep.subr.mxu0 0.0
    %281 = vmatpush2.msra.mxu0 0.0
    %282 = vmatprep.subr.mxu0 0.0
    %283 = vmatpush2.msra.mxu0 0.0
    %284 = vmatprep.subr.mxu0 0.0
    %285 = vmatpush2.msra.mxu0 0.0
    %286 = vmatprep.mubr.f32.mxu0 0.0
    %287 = vmatmul.mubr.f32.gmra.mxu0 %v211
    %v288 = vpop.f32.mrf.mxu0
    %v289 = vadd.f32 0.0, %v288
    %v290 = vpop.f32.mrf.mxu0
    %v291 = vadd.f32 0.0, %v290
    %292 = vmatprep.mubr.f32.mxu0 0.0
    %293 = vmatmul.mubr.f32.gmra.mxu0 %v214
    %v294 = vpop.f32.mrf.mxu0
    %v295 = vadd.f32 0.0, %v294
    %v296 = vpop.f32.mrf.mxu0
    %v297 = vadd.f32 0.0, %v296
    %298 = vmatprep.mubr.f32.mxu0 0.0
    %299 = vmatmul.mubr.f32.gmra.mxu0 %v217
    %v300 = vpop.f32.mrf.mxu0
    %v301 = vadd.f32 0.0, %v300
    %v302 = vpop.f32.mrf.mxu0
    %v303 = vadd.f32 0.0, %v302
    %304 = vmatprep.mubr.f32.mxu0 0.0
    %305 = vmatmul.mubr.f32.gmra.mxu0 %v220
    %v306 = vpop.f32.mrf.mxu0
    %v307 = vadd.f32 0.0, %v306
    %v308 = vpop.f32.mrf.mxu0
    %v309 = vadd.f32 0.0, %v308
    %310 = vdwg.mxu0
    %v311 = vld [vmem:[#allocation5] sm:$0xf]
    %v312 = vsub.f32 %v70, %v289
    %v313 = vsub.f32 %v71, %v291
    %v314 = vsub.f32 %v72, %v295
    %v315 = vsub.f32 %v73, %v297
    %v316 = vmul.f32 %v312, %v301
    %v317 = vmul.f32 %v313, %v303
    %v318 = vmul.f32 %v314, %v307
    %v319 = vmul.f32 %v315, %v309
    %v321 = vlaneseq
    %v322 = vshrl.u32 %v321, 7
    %v323 = vsub.s32 0, %v322
    %v324 = vrot.slane %v311, %v323
    %v325 = vlaneseq
    %v326 = vshrl.u32 %v325, 7
    %v327 = vsub.s32 2, %v326
    %v328 = vrot.slane %v311, %v327
    %v331 = vlaneseq
    %v332 = vshrl.u32 %v331, 7
    %v333 = vsub.s32 0, %v332
    %v334 = vrot.slane %v324, %v333
    %v335 = vlaneseq
    %v336 = vshrl.u32 %v335, 7
    %v337 = vsub.s32 0, %v336
    %v338 = vrot.slane %v328, %v337
    %v339 = vmul.f32 %v316, %v334
    %v340 = vmul.f32 %v317, %v338
    %v341 = vmul.f32 %v318, %v334
    %v342 = vmul.f32 %v319, %v338
    %v343 = vlaneseq
    %v344 = vshrl.u32 %v343, 7
    %v345 = vsub.s32 1, %v344
    %v346 = vrot.slane %v311, %v345
    %v347 = vlaneseq
    %v348 = vshrl.u32 %v347, 7
    %v349 = vsub.s32 3, %v348
    %v350 = vrot.slane %v311, %v349
    %v353 = vlaneseq
    %v354 = vshrl.u32 %v353, 7
    %v355 = vsub.s32 1, %v354
    %v356 = vrot.slane %v346, %v355
    %v357 = vlaneseq
    %v358 = vshrl.u32 %v357, 7
    %v359 = vsub.s32 1, %v358
    %v360 = vrot.slane %v350, %v359
    %v361 = vadd.f32 %v339, %v356
    %v362 = vadd.f32 %v340, %v360
    %v363 = vadd.f32 %v341, %v356
    %v364 = vadd.f32 %v342, %v360
    %v365 = vld [vmem:[%s4] sm:$0xf]
    %v366 = vld [vmem:[%s4 + $0x4] sm:$0xf]
    %v367 = vld [vmem:[%s4 + $0x8] sm:$0xf]
    %v368 = vld [vmem:[%s4 + $0xc] sm:$0xf]
    %v369 = vld [vmem:[%s4 + $0x10] sm:$0xf]
    %v370 = vld [vmem:[%s4 + $0x14] sm:$0xf]
    %v371 = vpack.c.bf16 %v363, %v361
    %v372 = vpack.c.bf16 %v364, %v362
    %v379 = vunpack.c.l.b16 %v365
    %v380 = vunpack.c.l.b16 %v366
    %v381 = vunpack.c.l.b16 %v367
    %v382 = vunpack.c.l.b16 %v368
    %v383 = vunpack.c.l.b16 %v369
    %v384 = vunpack.c.l.b16 %v370
    %v385 = vpack.c.b16 %v380, %v379
    %v386 = vpack.c.b16 %v382, %v381
    %v387 = vpack.c.b16 %v384, %v383
    %v389 = vsel %vm209, %v385, 0
    %v392 = vsel %vm209, %v386, 0
    %v395 = vsel %vm209, %v387, 0
    %397 = vmatprep.subr.bf16.mxu0 0
    %398 = vmatpush1.bf16.msra.mxu0 0
    %399 = vmatprep.subr.bf16.mxu0 0
    %400 = vmatpush1.bf16.msra.mxu0 0
    %401 = vmatprep.subr.bf16.mxu0 0
    %402 = vmatpush1.bf16.msra.mxu0 0
    %403 = vmatprep.subr.bf16.mxu0 0
    %404 = vmatpush1.bf16.msra.mxu0 0
    %405 = vmatprep.subr.bf16.mxu0 0
    %406 = vmatpush1.bf16.msra.mxu0 0
    %407 = vmatprep.subr.bf16.mxu0 0
    %408 = vmatpush1.bf16.msra.mxu0 0
    %409 = vmatprep.subr.bf16.mxu0 0
    %410 = vmatpush1.bf16.msra.mxu0 0
    %411 = vmatprep.subr.bf16.mxu0 %v372
    %412 = vmatpush1.bf16.msra.mxu0 %v371
    %413 = vmatprep.subr.bf16.mxu0 0
    %414 = vmatpush2.bf16.msra.mxu0 0
    %415 = vmatprep.subr.bf16.mxu0 0
    %416 = vmatpush2.bf16.msra.mxu0 0
    %417 = vmatprep.subr.bf16.mxu0 0
    %418 = vmatpush2.bf16.msra.mxu0 0
    %419 = vmatprep.subr.bf16.mxu0 0
    %420 = vmatpush2.bf16.msra.mxu0 0
    %421 = vmatprep.subr.bf16.mxu0 0
    %422 = vmatpush2.bf16.msra.mxu0 0
    %423 = vmatprep.subr.bf16.mxu0 0
    %424 = vmatpush2.bf16.msra.mxu0 0
    %425 = vmatprep.subr.bf16.mxu0 0
    %426 = vmatpush2.bf16.msra.mxu0 0
    %427 = vmatprep.subr.bf16.mxu0 0
    %428 = vmatpush2.bf16.msra.mxu0 0
    %429 = vmatprep.mubr.bf16.mxu0 0
    %430 = vmatmul.mubr.bf16.gmra.mxu0 %v389
    %v431 = vpop.f32.mrf.mxu0
    %v432 = vadd.f32 0.0, %v431
    %v433 = vpop.f32.mrf.mxu0
    %v434 = vadd.f32 0.0, %v433
    %v435 = vpop.f32.mrf.mxu0
    %v436 = vadd.f32 0.0, %v435
    %v437 = vpop.f32.mrf.mxu0
    %v438 = vadd.f32 0.0, %v437
    %439 = vmatprep.mubr.bf16.mxu0 0
    %440 = vmatmul.mubr.bf16.gmra.mxu0 %v392
    %v441 = vpop.f32.mrf.mxu0
    %v442 = vadd.f32 0.0, %v441
    %v443 = vpop.f32.mrf.mxu0
    %v444 = vadd.f32 0.0, %v443
    %v445 = vpop.f32.mrf.mxu0
    %v446 = vadd.f32 0.0, %v445
    %v447 = vpop.f32.mrf.mxu0
    %v448 = vadd.f32 0.0, %v447
    %449 = vmatprep.mubr.bf16.mxu0 0
    %450 = vmatmul.mubr.bf16.gmra.mxu0 %v395
    %v451 = vpop.f32.mrf.mxu0
    %v452 = vadd.f32 0.0, %v451
    %v453 = vpop.f32.mrf.mxu0
    %v454 = vadd.f32 0.0, %v453
    %v455 = vpop.f32.mrf.mxu0
    %v456 = vadd.f32 0.0, %v455
    %v457 = vpop.f32.mrf.mxu0
    %v458 = vadd.f32 0.0, %v457
    %459 = vdwg.mxu0
    %v460 = vmul.f32 %v432, %v442
    %v461 = vmul.f32 %v434, %v444
    %v462 = vmul.f32 %v436, %v446
    %v463 = vmul.f32 %v438, %v448
    %s464 = scalar_lea.vmem %s5, 128
    %v465 = vld [vmem:[%s464] sm:$0xff]
    %v466 = vld [vmem:[%s464 + $0x8] sm:$0xff]
    %v467 = vld [vmem:[%s464 + $0x10] sm:$0xff]
    %v468 = vld [vmem:[%s464 + $0x18] sm:$0xff]
    %v469 = vmul.f32 %v460, %v465
    %v470 = vmul.f32 %v461, %v466
    %v471 = vmul.f32 %v462, %v467
    %v472 = vmul.f32 %v463, %v468
    %473 = vrot.lane.b32.xlu0 %v460, 17
    %v474 = vpop.permute.xlu0 %473
    %475 = vrot.lane.b32.xlu0 %v462, 17
    %v476 = vpop.permute.xlu0 %475
    %477 = vrot.lane.b32.xlu0 %v461, 17
    %v478 = vpop.permute.xlu0 %477
    %479 = vrot.lane.b32.xlu0 %v463, 17
    %v480 = vpop.permute.xlu0 %479
    %v481 = vlaneseq
    %v482 = vand.u32 %v481, 127
    %vm483 = vcmp.lt.s32.totalorder %v482, 17
    %v484 = vsel %vm483, %v474, %v478
    %v485 = vsel %vm483, %v476, %v480
    %v486 = vsel %vm483, %v478, %v474
    %v487 = vsel %vm483, %v480, %v476
    %v488 = vld [vmem:[%s5] sm:$0xff]
    %v489 = vld [vmem:[%s5 + $0x8] sm:$0xff]
    %v490 = vld [vmem:[%s5 + $0x10] sm:$0xff]
    %v491 = vld [vmem:[%s5 + $0x18] sm:$0xff]
    %v492 = vmul.f32 %v486, %v488
    %v493 = vmul.f32 %v484, %v489
    %v494 = vmul.f32 %v487, %v490
    %v495 = vmul.f32 %v485, %v491
    %v496 = vadd.f32 %v469, %v492
    %v497 = vadd.f32 %v470, %v493
    %v498 = vadd.f32 %v471, %v494
    %v499 = vadd.f32 %v472, %v495
    %500 = vrot.lane.b32.xlu0 %v460, 16
    %v501 = vpop.permute.xlu0 %500
    %502 = vrot.lane.b32.xlu0 %v462, 16
    %v503 = vpop.permute.xlu0 %502
    %504 = vrot.lane.b32.xlu0 %v461, 16
    %v505 = vpop.permute.xlu0 %504
    %506 = vrot.lane.b32.xlu0 %v463, 16
    %v507 = vpop.permute.xlu0 %506
    %vm508 = vcmp.lt.s32.totalorder %v482, 16
    %v509 = vsel %vm508, %v501, %v505
    %v510 = vsel %vm508, %v503, %v507
    %v511 = vsel %vm508, %v505, %v501
    %v512 = vsel %vm508, %v507, %v503
    %s513 = scalar_lea.vmem %s5, 32
    %v514 = vld [vmem:[%s513] sm:$0xff]
    %v515 = vld [vmem:[%s513 + $0x8] sm:$0xff]
    %v516 = vld [vmem:[%s513 + $0x10] sm:$0xff]
    %v517 = vld [vmem:[%s513 + $0x18] sm:$0xff]
    %v518 = vmul.f32 %v511, %v514
    %v519 = vmul.f32 %v509, %v515
    %v520 = vmul.f32 %v512, %v516
    %v521 = vmul.f32 %v510, %v517
    %v522 = vadd.f32 %v496, %v518
    %v523 = vadd.f32 %v497, %v519
    %v524 = vadd.f32 %v498, %v520
    %v525 = vadd.f32 %v499, %v521
    %526 = vrot.lane.b32.xlu0 %v460, 15
    %v527 = vpop.permute.xlu0 %526
    %528 = vrot.lane.b32.xlu0 %v462, 15
    %v529 = vpop.permute.xlu0 %528
    %530 = vrot.lane.b32.xlu0 %v461, 15
    %v531 = vpop.permute.xlu0 %530
    %532 = vrot.lane.b32.xlu0 %v463, 15
    %v533 = vpop.permute.xlu0 %532
    %vm534 = vcmp.lt.s32.totalorder %v482, 15
    %v535 = vsel %vm534, %v527, %v531
    %v536 = vsel %vm534, %v529, %v533
    %v537 = vsel %vm534, %v531, %v527
    %v538 = vsel %vm534, %v533, %v529
    %s539 = scalar_lea.vmem %s5, 64
    %v540 = vld [vmem:[%s539] sm:$0xff]
    %v541 = vld [vmem:[%s539 + $0x8] sm:$0xff]
    %v542 = vld [vmem:[%s539 + $0x10] sm:$0xff]
    %v543 = vld [vmem:[%s539 + $0x18] sm:$0xff]
    %v544 = vmul.f32 %v537, %v540
    %v545 = vmul.f32 %v535, %v541
    %v546 = vmul.f32 %v538, %v542
    %v547 = vmul.f32 %v536, %v543
    %v548 = vadd.f32 %v522, %v544
    %v549 = vadd.f32 %v523, %v545
    %v550 = vadd.f32 %v524, %v546
    %v551 = vadd.f32 %v525, %v547
    %552 = vrot.lane.b32.xlu0 %v460, 1
    %v553 = vpop.permute.xlu0 %552
    %554 = vrot.lane.b32.xlu0 %v462, 1
    %v555 = vpop.permute.xlu0 %554
    %556 = vrot.lane.b32.xlu0 %v461, 1
    %v557 = vpop.permute.xlu0 %556
    %558 = vrot.lane.b32.xlu0 %v463, 1
    %v559 = vpop.permute.xlu0 %558
    %vm560 = vcmp.lt.s32.totalorder %v482, 1
    %v561 = vsel %vm560, %v553, %v557
    %v562 = vsel %vm560, %v555, %v559
    %v563 = vsel %vm560, %v557, %v553
    %v564 = vsel %vm560, %v559, %v555
    %s565 = scalar_lea.vmem %s5, 96
    %v566 = vld [vmem:[%s565] sm:$0xff]
    %v567 = vld [vmem:[%s565 + $0x8] sm:$0xff]
    %v568 = vld [vmem:[%s565 + $0x10] sm:$0xff]
    %v569 = vld [vmem:[%s565 + $0x18] sm:$0xff]
    %v570 = vmul.f32 %v563, %v566
    %v571 = vmul.f32 %v561, %v567
    %v572 = vmul.f32 %v564, %v568
    %v573 = vmul.f32 %v562, %v569
    %v574 = vadd.f32 %v548, %v570
    %v575 = vadd.f32 %v549, %v571
    %v576 = vadd.f32 %v550, %v572
    %v577 = vadd.f32 %v551, %v573
    %578 = vrot.lane.b32.xlu0 %v460, 127
    %v579 = vpop.permute.xlu0 %578
    %580 = vrot.lane.b32.xlu0 %v462, 127
    %v581 = vpop.permute.xlu0 %580
    %582 = vrot.lane.b32.xlu0 %v461, 127
    %v583 = vpop.permute.xlu0 %582
    %584 = vrot.lane.b32.xlu0 %v463, 127
    %v585 = vpop.permute.xlu0 %584
    %vm586 = vcmp.lt.s32.totalorder %v482, 127
    %v587 = vsel %vm586, %v579, %v583
    %v588 = vsel %vm586, %v581, %v585
    %v589 = vsel %vm586, %v583, %v579
    %v590 = vsel %vm586, %v585, %v581
    %s591 = scalar_lea.vmem %s5, 160
    %v592 = vld [vmem:[%s591] sm:$0xff]
    %v593 = vld [vmem:[%s591 + $0x8] sm:$0xff]
    %v594 = vld [vmem:[%s591 + $0x10] sm:$0xff]
    %v595 = vld [vmem:[%s591 + $0x18] sm:$0xff]
    %v596 = vmul.f32 %v587, %v592
    %v597 = vmul.f32 %v589, %v593
    %v598 = vmul.f32 %v588, %v594
    %v599 = vmul.f32 %v590, %v595
    %v600 = vadd.f32 %v574, %v596
    %v601 = vadd.f32 %v575, %v597
    %v602 = vadd.f32 %v576, %v598
    %v603 = vadd.f32 %v577, %v599
    %604 = vrot.lane.b32.xlu0 %v460, 113
    %v605 = vpop.permute.xlu0 %604
    %606 = vrot.lane.b32.xlu0 %v462, 113
    %v607 = vpop.permute.xlu0 %606
    %608 = vrot.lane.b32.xlu0 %v461, 113
    %v609 = vpop.permute.xlu0 %608
    %610 = vrot.lane.b32.xlu0 %v463, 113
    %v611 = vpop.permute.xlu0 %610
    %vm612 = vcmp.lt.s32.totalorder %v482, 113
    %v613 = vsel %vm612, %v605, %v609
    %v614 = vsel %vm612, %v607, %v611
    %v615 = vsel %vm612, %v609, %v605
    %v616 = vsel %vm612, %v611, %v607
    %s617 = scalar_lea.vmem %s5, 192
    %v618 = vld [vmem:[%s617] sm:$0xff]
    %v619 = vld [vmem:[%s617 + $0x8] sm:$0xff]
    %v620 = vld [vmem:[%s617 + $0x10] sm:$0xff]
    %v621 = vld [vmem:[%s617 + $0x18] sm:$0xff]
    %v622 = vmul.f32 %v613, %v618
    %v623 = vmul.f32 %v615, %v619
    %v624 = vmul.f32 %v614, %v620
    %v625 = vmul.f32 %v616, %v621
    %v626 = vadd.f32 %v600, %v622
    %v627 = vadd.f32 %v601, %v623
    %v628 = vadd.f32 %v602, %v624
    %v629 = vadd.f32 %v603, %v625
    %630 = vrot.lane.b32.xlu0 %v460, 112
    %v631 = vpop.permute.xlu0 %630
    %632 = vrot.lane.b32.xlu0 %v462, 112
    %v633 = vpop.permute.xlu0 %632
    %634 = vrot.lane.b32.xlu0 %v461, 112
    %v635 = vpop.permute.xlu0 %634
    %636 = vrot.lane.b32.xlu0 %v463, 112
    %v637 = vpop.permute.xlu0 %636
    %vm638 = vcmp.lt.s32.totalorder %v482, 112
    %v639 = vsel %vm638, %v631, %v635
    %v640 = vsel %vm638, %v633, %v637
    %v641 = vsel %vm638, %v635, %v631
    %v642 = vsel %vm638, %v637, %v633
    %s643 = scalar_lea.vmem %s5, 224
    %v644 = vld [vmem:[%s643] sm:$0xff]
    %v645 = vld [vmem:[%s643 + $0x8] sm:$0xff]
    %v646 = vld [vmem:[%s643 + $0x10] sm:$0xff]
    %v647 = vld [vmem:[%s643 + $0x18] sm:$0xff]
    %v648 = vmul.f32 %v639, %v644
    %v649 = vmul.f32 %v641, %v645
    %v650 = vmul.f32 %v640, %v646
    %v651 = vmul.f32 %v642, %v647
    %v652 = vadd.f32 %v626, %v648
    %v653 = vadd.f32 %v627, %v649
    %v654 = vadd.f32 %v628, %v650
    %v655 = vadd.f32 %v629, %v651
    %656 = vrot.lane.b32.xlu0 %v460, 111
    %v657 = vpop.permute.xlu0 %656
    %658 = vrot.lane.b32.xlu0 %v462, 111
    %v659 = vpop.permute.xlu0 %658
    %660 = vrot.lane.b32.xlu0 %v461, 111
    %v661 = vpop.permute.xlu0 %660
    %662 = vrot.lane.b32.xlu0 %v463, 111
    %v663 = vpop.permute.xlu0 %662
    %vm664 = vcmp.lt.s32.totalorder %v482, 111
    %v665 = vsel %vm664, %v657, %v661
    %v666 = vsel %vm664, %v659, %v663
    %v667 = vsel %vm664, %v661, %v657
    %v668 = vsel %vm664, %v663, %v659
    %s669 = scalar_lea.vmem %s5, 256
    %v670 = vld [vmem:[%s669] sm:$0xff]
    %v671 = vld [vmem:[%s669 + $0x8] sm:$0xff]
    %v672 = vld [vmem:[%s669 + $0x10] sm:$0xff]
    %v673 = vld [vmem:[%s669 + $0x18] sm:$0xff]
    %v674 = vmul.f32 %v665, %v670
    %v675 = vmul.f32 %v667, %v671
    %v676 = vmul.f32 %v666, %v672
    %v677 = vmul.f32 %v668, %v673
    %v678 = vadd.f32 %v652, %v674
    %v679 = vadd.f32 %v653, %v675
    %v680 = vadd.f32 %v654, %v676
    %v681 = vadd.f32 %v655, %v677
    %v682 = vld [vmem:[%s6] sm:$0xf]
    %v683 = vld [vmem:[%s6 + $0x4] sm:$0xf]
    %v684 = vpack.c.bf16 %v680, %v678
    %v685 = vpack.c.bf16 %v681, %v679
    %v688 = vunpack.c.l.b16 %v682
    %v689 = vunpack.c.l.b16 %v683
    %v690 = vpack.c.b16 %v689, %v688
    %v692 = vsel %vm209, %v690, 0
    %694 = vmatprep.subr.bf16.mxu0 0
    %695 = vmatpush1.bf16.msra.mxu0 0
    %696 = vmatprep.subr.bf16.mxu0 0
    %697 = vmatpush1.bf16.msra.mxu0 0
    %698 = vmatprep.subr.bf16.mxu0 0
    %699 = vmatpush1.bf16.msra.mxu0 0
    %700 = vmatprep.subr.bf16.mxu0 0
    %701 = vmatpush1.bf16.msra.mxu0 0
    %702 = vmatprep.subr.bf16.mxu0 0
    %703 = vmatpush1.bf16.msra.mxu0 0
    %704 = vmatprep.subr.bf16.mxu0 0
    %705 = vmatpush1.bf16.msra.mxu0 0
    %706 = vmatprep.subr.bf16.mxu0 0
    %707 = vmatpush1.bf16.msra.mxu0 0
    %708 = vmatprep.subr.bf16.mxu0 %v685
    %709 = vmatpush1.bf16.msra.mxu0 %v684
    %710 = vmatprep.subr.bf16.mxu0 0
    %711 = vmatpush2.bf16.msra.mxu0 0
    %712 = vmatprep.subr.bf16.mxu0 0
    %713 = vmatpush2.bf16.msra.mxu0 0
    %714 = vmatprep.subr.bf16.mxu0 0
    %715 = vmatpush2.bf16.msra.mxu0 0
    %716 = vmatprep.subr.bf16.mxu0 0
    %717 = vmatpush2.bf16.msra.mxu0 0
    %718 = vmatprep.subr.bf16.mxu0 0
    %719 = vmatpush2.bf16.msra.mxu0 0
    %720 = vmatprep.subr.bf16.mxu0 0
    %721 = vmatpush2.bf16.msra.mxu0 0
    %722 = vmatprep.subr.bf16.mxu0 0
    %723 = vmatpush2.bf16.msra.mxu0 0
    %724 = vmatprep.subr.bf16.mxu0 0
    %725 = vmatpush2.bf16.msra.mxu0 0
    %726 = vmatprep.mubr.bf16.mxu0 0
    %727 = vmatmul.mubr.bf16.gmra.mxu0 %v692
    %v728 = vpop.f32.mrf.mxu0
    %v729 = vadd.f32 0.0, %v728
    %v730 = vpop.f32.mrf.mxu0
    %v731 = vadd.f32 0.0, %v730
    %v732 = vpop.f32.mrf.mxu0
    %v733 = vadd.f32 0.0, %v732
    %v734 = vpop.f32.mrf.mxu0
    %v735 = vadd.f32 0.0, %v734
    %736 = vdwg.mxu0
    %v737 = vxor.u32 %v729, 2147483648
    %v738 = vxor.u32 %v731, 2147483648
    %v739 = vxor.u32 %v733, 2147483648
    %v740 = vxor.u32 %v735, 2147483648
    %v741 = vmul.f32 %v737, 1.442695
    %v742 = vpow.pop %v741
    %v743 = vmul.f32 %v738, 1.442695
    %v744 = vpow.pop %v743
    %v745 = vmul.f32 %v739, 1.442695
    %v746 = vpow.pop %v745
    %v747 = vmul.f32 %v740, 1.442695
    %v748 = vpow.pop %v747
    %v749 = vadd.f32 %v742, 1.0
    %v750 = vadd.f32 %v744, 1.0
    %v751 = vadd.f32 %v746, 1.0
    %v752 = vadd.f32 %v748, 1.0
    %v753 = vrcp.pop %v749
    %v754 = vmul.f32 1.0, %v753
    %v755 = vrcp.pop %v750
    %v756 = vmul.f32 1.0, %v755
    %v757 = vrcp.pop %v751
    %v758 = vmul.f32 1.0, %v757
    %v759 = vrcp.pop %v752
    %v760 = vmul.f32 1.0, %v759
    %v761 = vld [vmem:[#allocation7] sm:$0xf]
    %v762 = vld [vmem:[#allocation7 + $0x4] sm:$0xf]
    %v763 = vmul.f32 %v452, %v754
    %v764 = vmul.f32 %v454, %v756
    %v765 = vmul.f32 %v456, %v758
    %v766 = vmul.f32 %v458, %v760
    %v767 = vpack.c.bf16 %v765, %v763
    %v768 = vpack.c.bf16 %v766, %v764
    %v771 = vunpack.c.l.b16 %v761
    %v772 = vunpack.c.l.b16 %v762
    %v773 = vpack.c.b16 %v772, %v771
    %v775 = vsel %vm209, %v773, 0
    %777 = vmatprep.subr.bf16.mxu0 0
    %778 = vmatpush1.bf16.msra.mxu0 0
    %779 = vmatprep.subr.bf16.mxu0 0
    %780 = vmatpush1.bf16.msra.mxu0 0
    %781 = vmatprep.subr.bf16.mxu0 0
    %782 = vmatpush1.bf16.msra.mxu0 0
    %783 = vmatprep.subr.bf16.mxu0 0
    %784 = vmatpush1.bf16.msra.mxu0 0
    %785 = vmatprep.subr.bf16.mxu0 0
    %786 = vmatpush1.bf16.msra.mxu0 0
    %787 = vmatprep.subr.bf16.mxu0 0
    %788 = vmatpush1.bf16.msra.mxu0 0
    %789 = vmatprep.subr.bf16.mxu0 0
    %790 = vmatpush1.bf16.msra.mxu0 0
    %791 = vmatprep.subr.bf16.mxu0 %v768
    %792 = vmatpush1.bf16.msra.mxu0 %v767
    %793 = vmatprep.subr.bf16.mxu0 0
    %794 = vmatpush2.bf16.msra.mxu0 0
    %795 = vmatprep.subr.bf16.mxu0 0
    %796 = vmatpush2.bf16.msra.mxu0 0
    %797 = vmatprep.subr.bf16.mxu0 0
    %798 = vmatpush2.bf16.msra.mxu0 0
    %799 = vmatprep.subr.bf16.mxu0 0
    %800 = vmatpush2.bf16.msra.mxu0 0
    %801 = vmatprep.subr.bf16.mxu0 0
    %802 = vmatpush2.bf16.msra.mxu0 0
    %803 = vmatprep.subr.bf16.mxu0 0
    %804 = vmatpush2.bf16.msra.mxu0 0
    %805 = vmatprep.subr.bf16.mxu0 0
    %806 = vmatpush2.bf16.msra.mxu0 0
    %807 = vmatprep.subr.bf16.mxu0 0
    %808 = vmatpush2.bf16.msra.mxu0 0
    %809 = vmatprep.mubr.bf16.mxu0 0
    %810 = vmatmul.mubr.bf16.gmra.mxu0 %v775
    %v811 = vpop.f32.mrf.mxu0
    %v812 = vadd.f32 0.0, %v811
    %v813 = vpop.f32.mrf.mxu0
    %v814 = vadd.f32 0.0, %v813
    %v815 = vpop.f32.mrf.mxu0
    %v816 = vadd.f32 0.0, %v815
    %v817 = vpop.f32.mrf.mxu0
    %v818 = vadd.f32 0.0, %v817
    %819 = vdwg.mxu0
    %820 = vst [vmem:[#allocation8] sm:$0xff] %v812
    %821 = vst [vmem:[#allocation8 + $0x8] sm:$0xff] %v814
    %822 = vst [vmem:[#allocation8 + $0x10] sm:$0xff] %v816
    %823 = vst [vmem:[#allocation8 + $0x18] sm:$0xff] %v818
    // Predicated region
    $region46: #{tpu_custom_call.1} parent=1 // pred_check
      _
    $region47: #{tpu_custom_call.1} parent=1 // pred_check_branch
      %825 = sbr.rel (0) target = $region49
    $region48: #{tpu_custom_call.1} parent=1 // pred_region
      %s827 = ssub.s32 512, 512
      %828 = vsyncadd [#allocation4], %s827
      %s829 = sshll.u32 [#allocation8], 4
      %s830 = int_to_ptr.vmem [resolvable:$true] %s829
      %835 = dma.vmem_to_hbm [thread:$0]  %s830, 512, %s8, [#allocation4], 256, 256, 16
    $region49: #{tpu_custom_call.1} parent=1 // pred_fallthru
      _
    // Predicated region
    $region50: #{tpu_custom_call.1} parent=1 // pred_check
      _
    $region51: #{tpu_custom_call.1} parent=1 // pred_check_branch
      %837 = sbr.rel (0) target = $region53
    $region52: #{tpu_custom_call.1} parent=1 // pred_region
      %838 = dma.done [#allocation4], 512
    $region53: #{tpu_custom_call.1} parent=1 // pred_fallthru
      _
    %839 = vsyncpa [#allocation3], 1
    %840 = vsyncpa [#allocation6], 1
    %841 = vsyncpa [#allocation4], 1

</llo_original>
